<compile_context>
chip_gen: v7x
topology: tpu7x:2x2x1
jax: 0.10.0
libtpu: 0.0.40
codegen_flags: <defaults>
</compile_context>

<pallas_src>
import functools

import jax
import jax.numpy as jnp
from jax.experimental import pallas as pl
from jax.experimental.pallas import tpu as pltpu


# ------------------------------ tiling helper ------------------------------

def _pick_tile(dim, target, align):
    """Largest tile <= target that divides dim and is a multiple of `align`.
    Falls back to the full dimension (always a legal block size)."""
    if dim <= target:
        return dim
    t = (target // align) * align
    while t >= align:
        if dim % t == 0:
            return t
        t -= align
    return dim


# --------------------------- fused CE + L1 kernel ---------------------------

def _fused_kernel(x_ref, y_ref, p_ref, ce_out, l1_out,
                  m_sc, s_sc, t_sc, ce_acc, l1_acc):
    i = pl.program_id(0)          # row tile
    c = pl.program_id(1)          # class tile
    k = pl.program_id(2)          # perturbation repeat
    nt = pl.num_programs(0)
    nc = pl.num_programs(1)
    nk = pl.num_programs(2)
    tc = x_ref.shape[1]

    # Zero the cross-grid accumulators once.
    @pl.when((i == 0) & (c == 0) & (k == 0))
    def _():
        ce_acc[...] = jnp.zeros_like(ce_acc)
        l1_acc[...] = jnp.zeros_like(l1_acc)

    x = x_ref[...].astype(jnp.float32)   # f32 compute (mandatory on v5e VPU/EUP)

    # ---- cross entropy: online logsumexp over class tiles, only at k == 0 ----
    @pl.when((k == 0) & (c == 0))
    def _():
        m_sc[...] = jnp.full_like(m_sc, -jnp.inf)
        s_sc[...] = jnp.zeros_like(s_sc)
        t_sc[...] = jnp.zeros_like(t_sc)

    @pl.when(k == 0)
    def _():
        y = y_ref[...]                                           # [tn, 1] int32
        col = c * tc + jax.lax.broadcasted_iota(jnp.int32, x.shape, 1)
        m_old = m_sc[...]
        m_new = jnp.maximum(m_old, jnp.max(x, axis=-1, keepdims=True))
        s_sc[...] = (s_sc[...] * jnp.exp(m_old - m_new)
                     + jnp.sum(jnp.exp(x - m_new), axis=-1, keepdims=True))
        t_sc[...] = t_sc[...] + jnp.sum(jnp.where(col == y, x, 0.0),
                                        axis=-1, keepdims=True)
        m_sc[...] = m_new

    @pl.when((k == 0) & (c == nc - 1))
    def _():
        # per-row NLL for this row tile; accumulate across row tiles.
        ce_acc[...] += jnp.log(s_sc[...]) + m_sc[...] - t_sc[...]

    # ---- L1 vs. the k-th repeat of x: pure VPU elementwise accumulation ----
    l1_acc[...] += jnp.abs(x - p_ref[...].astype(jnp.float32))

    # ---- one cross-lane reduce + scalar store, only at the last grid step ----
    @pl.when((i == nt - 1) & (c == nc - 1) & (k == nk - 1))
    def _():
        ce_out[0, 0] = jnp.sum(ce_acc[...])
        l1_out[0, 0] = jnp.sum(l1_acc[...])


@functools.partial(jax.jit, static_argnames=("k", "tn", "tc"))
def _fused_sums(x, y2, perturbations, *, k, tn, tc):
    """Returns (sum of per-row NLL, sum of |x.repeat(k,1) - perturbations|)."""
    n, cdim = x.shape
    nt, nc = n // tn, cdim // tc
    ce_sum, l1_sum = pl.pallas_call(
        _fused_kernel,
        out_shape=(jax.ShapeDtypeStruct((1, 1), jnp.float32),
                   jax.ShapeDtypeStruct((1, 1), jnp.float32)),
        grid=(nt, nc, k),
        in_specs=[
            # x: index independent of the repeat axis -> DMA'd once per (i, c)
            # and reused across the (innermost) repeat loop.
            pl.BlockSpec((tn, tc), lambda i, c, kk: (i, c)),
            pl.BlockSpec((tn, 1), lambda i, c, kk: (i, 0)),
            # perturbations are laid out like x.repeat(k, 1): block (kk*nt + i, c).
            pl.BlockSpec((tn, tc), lambda i, c, kk: (kk * nt + i, c)),
        ],
        out_specs=(pl.BlockSpec(memory_space=pltpu.SMEM),
                   pl.BlockSpec(memory_space=pltpu.SMEM)),
        scratch_shapes=[pltpu.VMEM((tn, 1), jnp.float32),    # running max
                        pltpu.VMEM((tn, 1), jnp.float32),    # running sum-exp
                        pltpu.VMEM((tn, 1), jnp.float32),    # target logit
                        pltpu.VMEM((tn, 1), jnp.float32),    # CE accumulator
                        pltpu.VMEM((tn, tc), jnp.float32)],  # L1 accumulator
        compiler_params=pltpu.CompilerParams(
            dimension_semantics=("arbitrary", "arbitrary", "arbitrary"),
            vmem_limit_bytes=32 << 20),
    )(x, y2, perturbations)
    return ce_sum[0, 0], l1_sum[0, 0]


# ----------------------- CE-only kernel (no perturbations) -----------------------

def _ce_only_kernel(x_ref, y_ref, ce_out, m_sc, s_sc, t_sc, ce_acc):
    i = pl.program_id(0)
    c = pl.program_id(1)
    nt = pl.num_programs(0)
    nc = pl.num_programs(1)
    tc = x_ref.shape[1]

    @pl.when((i == 0) & (c == 0))
    def _():
        ce_acc[...] = jnp.zeros_like(ce_acc)

    @pl.when(c == 0)
    def _():
        m_sc[...] = jnp.full_like(m_sc, -jnp.inf)
        s_sc[...] = jnp.zeros_like(s_sc)
        t_sc[...] = jnp.zeros_like(t_sc)

    x = x_ref[...].astype(jnp.float32)
    y = y_ref[...]
    col = c * tc + jax.lax.broadcasted_iota(jnp.int32, x.shape, 1)
    m_old = m_sc[...]
    m_new = jnp.maximum(m_old, jnp.max(x, axis=-1, keepdims=True))
    s_sc[...] = (s_sc[...] * jnp.exp(m_old - m_new)
                 + jnp.sum(jnp.exp(x - m_new), axis=-1, keepdims=True))
    t_sc[...] = t_sc[...] + jnp.sum(jnp.where(col == y, x, 0.0),
                                    axis=-1, keepdims=True)
    m_sc[...] = m_new

    @pl.when(c == nc - 1)
    def _():
        ce_acc[...] += jnp.log(s_sc[...]) + m_sc[...] - t_sc[...]

    @pl.when((i == nt - 1) & (c == nc - 1))
    def _():
        ce_out[0, 0] = jnp.sum(ce_acc[...])


@functools.partial(jax.jit, static_argnames=("tn", "tc"))
def _ce_sum(x, y2, *, tn, tc):
    n, cdim = x.shape
    nt, nc = n // tn, cdim // tc
    out = pl.pallas_call(
        _ce_only_kernel,
        out_shape=jax.ShapeDtypeStruct((1, 1), jnp.float32),
        grid=(nt, nc),
        in_specs=[pl.BlockSpec((tn, tc), lambda i, c: (i, c)),
                  pl.BlockSpec((tn, 1), lambda i, c: (i, 0))],
        out_specs=pl.BlockSpec(memory_space=pltpu.SMEM),
        scratch_shapes=[pltpu.VMEM((tn, 1), jnp.float32)] * 4,
        compiler_params=pltpu.CompilerParams(
            dimension_semantics=("arbitrary", "arbitrary"),
            vmem_limit_bytes=32 << 20),
    )(x, y2)
    return out[0, 0]


# --------------------------------- forward ---------------------------------

def hessian_ce_loss(x, y, perturbations, config, *, tile_n=None, tile_c=None):
    """Forward pass of HessianCELoss. Returns (total, cross_entropy, curvature)
    as jnp scalars (no host sync)."""
    n, cdim = x.shape
    y2 = y.reshape(n, 1).astype(jnp.int32)   # assumes 0 <= y < C (no ignore_index)

    tn = tile_n if tile_n is not None else _pick_tile(n, 256, 8)
    tc = tile_c if tile_c is not None else _pick_tile(cdim, 2048, 128)
    assert n % tn == 0 and (tn == n or tn % 8 == 0), (n, tn)
    assert cdim % tc == 0 and (tc == cdim or tc % 128 == 0), (cdim, tc)

    if perturbations is not None:
        k = int(config['perturb_amount'])
        assert perturbations.shape == (k * n, cdim)
        ce_total, l1_total = _fused_sums(x, y2, perturbations, k=k, tn=tn, tc=tc)
        ce = ce_total / n
        perturb_loss = config['perturb_loss'] * (l1_total / (k * n * cdim))
    else:
        ce = _ce_sum(x, y2, tn=tn, tc=tc) / n
        perturb_loss = jnp.float32(0.0)

    if config['l'] == 1.0:
        curvature = jnp.float32(0.0)
    else:
        # TODO(synk): curvature = sum(hessian(dCE/dtheta, net)^2) needs second-order
        # autograd through the wrapped network's parameters; no network exists in
        # this standalone kernel, so this branch is not implemented.
        curvature = jnp.float32(0.0)

    total = ce * config['l'] + curvature * (1.0 - config['l']) + perturb_loss
    return total, ce, curvature


# ---------------------------------- main ------------------------------------

if __name__ == "__main__":
    key = jax.random.PRNGKey(0)
    N, C, K = 16, 256, 3                      # batch, classes, perturb_amount
    k1, k2, k3 = jax.random.split(key, 3)

    x = jax.random.normal(k1, (N, C), jnp.float32)              # logits
    y = jax.random.randint(k2, (N,), 0, C, jnp.int32)            # integer targets
    perturbations = jax.random.normal(k3, (K * N, C), jnp.float32)

    config = {'l': 1.0, 'perturb_loss': 0.5, 'perturb_amount': K}

    # Small tiles so the multi-tile (row-tile x class-tile x repeat) path with
    # online logsumexp is actually exercised: grid = (2, 2, 3).
    total, ce, curv = hessian_ce_loss(x, y, perturbations, config,
                                      tile_n=8, tile_c=128)
    total_np, ce_np, _ = hessian_ce_loss(x, y, None, config,
                                         tile_n=8, tile_c=128)
    jax.block_until_ready((total, total_np))

    # sanity check against plain-JAX reference
    ref_ce = jnp.mean(jax.nn.logsumexp(x, axis=-1) - x[jnp.arange(N), y])
    ref_l1 = jnp.mean(jnp.abs(jnp.tile(x, (K, 1)) - perturbations))
    ref_total = ref_ce * config['l'] + config['perturb_loss'] * ref_l1

    assert jnp.allclose(total, ref_total, rtol=1e-4, atol=1e-5), (total, ref_total)
    assert jnp.allclose(ce, ref_ce, rtol=1e-4, atol=1e-5), (ce, ref_ce)
    assert jnp.allclose(total_np, ref_ce * config['l'], rtol=1e-4, atol=1e-5), (
        total_np, ref_ce)

    print("KERNEL_OK")
</pallas_src>

<mosaic_0001>
module attributes {stable_mosaic.version = 11 : i64} {
  func.func @_fused_kernel(%arg0: i32, %arg1: i32, %arg2: i32, %arg3: memref<8x128xf32, #tpu.memory_space<vmem>>, %arg4: memref<8x1xi32, #tpu.memory_space<vmem>>, %arg5: memref<8x128xf32, #tpu.memory_space<vmem>>, %arg6: memref<1x1xf32, #tpu.memory_space<smem>>, %arg7: memref<1x1xf32, #tpu.memory_space<smem>>, %arg8: memref<8x1xf32, #tpu.memory_space<vmem>>, %arg9: memref<8x1xf32, #tpu.memory_space<vmem>>, %arg10: memref<8x1xf32, #tpu.memory_space<vmem>>, %arg11: memref<8x1xf32, #tpu.memory_space<vmem>>, %arg12: memref<8x128xf32, #tpu.memory_space<vmem>>) attributes {dimension_semantics = [#tpu.dimension_semantics<arbitrary>, #tpu.dimension_semantics<arbitrary>, #tpu.dimension_semantics<arbitrary>], iteration_bounds = array<i64: 2, 2, 3>, scalar_prefetch = 0 : i64, scratch_operands = 5 : i64, tpu.core_type = #tpu.core_type<tc>, window_params = [{transform_indices = @transform_0, window_bounds = array<i64: 8, 128>}, {transform_indices = @transform_1, window_bounds = array<i64: 8, 1>}, {transform_indices = @transform_2, window_bounds = array<i64: 8, 128>}, {transform_indices = @transform_3, window_bounds = array<i64: 1, 1>}, {transform_indices = @transform_4, window_bounds = array<i64: 1, 1>}]} {
    %c0_i32 = arith.constant 0 : i32
    %0 = arith.cmpi eq, %arg0, %c0_i32 : i32
    %c0_i32_0 = arith.constant 0 : i32
    %1 = arith.cmpi eq, %arg1, %c0_i32_0 : i32
    %2 = arith.andi %0, %1 : i1
    %c0_i32_1 = arith.constant 0 : i32
    %3 = arith.cmpi eq, %arg2, %c0_i32_1 : i32
    %4 = arith.andi %2, %3 : i1
    %5 = arith.extui %4 : i1 to i32
    %c0_i32_2 = arith.constant 0 : i32
    %6 = arith.cmpi ne, %5, %c0_i32_2 : i32
    scf.if %6 {
      %cst = arith.constant 0.000000e+00 : f32
      %34 = vector.broadcast %cst : f32 to vector<8x1xf32>
      %c0_20 = arith.constant 0 : index
      %c0_21 = arith.constant 0 : index
      %35 = vector.load %arg11[%c0_20, %c0_21] : memref<8x1xf32, #tpu.memory_space<vmem>>, vector<8x1xf32>
      tpu.vector_store %arg11[%c0_20, %c0_21], %34 {strides = array<i32>} : memref<8x1xf32, #tpu.memory_space<vmem>>, vector<8x1xf32>,
      %cst_22 = arith.constant 0.000000e+00 : f32
      %36 = vector.broadcast %cst_22 : f32 to vector<8x128xf32>
      %c0_23 = arith.constant 0 : index
      %c0_24 = arith.constant 0 : index
      %37 = vector.load %arg12[%c0_23, %c0_24] : memref<8x128xf32, #tpu.memory_space<vmem>>, vector<8x128xf32>
      tpu.vector_store %arg12[%c0_23, %c0_24], %36 {strides = array<i32>} : memref<8x128xf32, #tpu.memory_space<vmem>>, vector<8x128xf32>,
    } else {
    }
    %c0 = arith.constant 0 : index
    %c0_3 = arith.constant 0 : index
    %7 = vector.load %arg3[%c0, %c0_3] : memref<8x128xf32, #tpu.memory_space<vmem>>, vector<8x128xf32>
    %c0_i32_4 = arith.constant 0 : i32
    %8 = arith.cmpi eq, %arg2, %c0_i32_4 : i32
    %c0_i32_5 = arith.constant 0 : i32
    %9 = arith.cmpi eq, %arg1, %c0_i32_5 : i32
    %10 = arith.andi %8, %9 : i1
    %11 = arith.extui %10 : i1 to i32
    %c0_i32_6 = arith.constant 0 : i32
    %12 = arith.cmpi ne, %11, %c0_i32_6 : i32
    scf.if %12 {
      %cst = arith.constant 0xFF800000 : f32
      %34 = vector.broadcast %cst : f32 to vector<8x1xf32>
      %c0_20 = arith.constant 0 : index
      %c0_21 = arith.constant 0 : index
      %35 = vector.load %arg8[%c0_20, %c0_21] : memref<8x1xf32, #tpu.memory_space<vmem>>, vector<8x1xf32>
      tpu.vector_store %arg8[%c0_20, %c0_21], %34 {strides = array<i32>} : memref<8x1xf32, #tpu.memory_space<vmem>>, vector<8x1xf32>,
      %cst_22 = arith.constant 0.000000e+00 : f32
      %36 = vector.broadcast %cst_22 : f32 to vector<8x1xf32>
      %c0_23 = arith.constant 0 : index
      %c0_24 = arith.constant 0 : index
      %37 = vector.load %arg9[%c0_23, %c0_24] : memref<8x1xf32, #tpu.memory_space<vmem>>, vector<8x1xf32>
      tpu.vector_store %arg9[%c0_23, %c0_24], %36 {strides = array<i32>} : memref<8x1xf32, #tpu.memory_space<vmem>>, vector<8x1xf32>,
      %cst_25 = arith.constant 0.000000e+00 : f32
      %38 = vector.broadcast %cst_25 : f32 to vector<8x1xf32>
      %c0_26 = arith.constant 0 : index
      %c0_27 = arith.constant 0 : index
      %39 = vector.load %arg10[%c0_26, %c0_27] : memref<8x1xf32, #tpu.memory_space<vmem>>, vector<8x1xf32>
      tpu.vector_store %arg10[%c0_26, %c0_27], %38 {strides = array<i32>} : memref<8x1xf32, #tpu.memory_space<vmem>>, vector<8x1xf32>,
    } else {
    }
    %c0_i32_7 = arith.constant 0 : i32
    %13 = arith.cmpi eq, %arg2, %c0_i32_7 : i32
    %14 = arith.extui %13 : i1 to i32
    %c0_i32_8 = arith.constant 0 : i32
    %15 = arith.cmpi ne, %14, %c0_i32_8 : i32
    scf.if %15 {
      %c0_20 = arith.constant 0 : index
      %c0_21 = arith.constant 0 : index
      %34 = vector.load %arg4[%c0_20, %c0_21] : memref<8x1xi32, #tpu.memory_space<vmem>>, vector<8x1xi32>
      %c128_i32 = arith.constant 128 : i32
      %35 = arith.muli %arg1, %c128_i32 : i32
      %36 = tpu.iota {dimensions = array<i32: 1>} : vector<8x128xi32>
      %37 = vector.broadcast %35 : i32 to vector<8x128xi32>
      %38 = arith.addi %37, %36 : vector<8x128xi32>
      %c0_22 = arith.constant 0 : index
      %c0_23 = arith.constant 0 : index
      %39 = vector.load %arg8[%c0_22, %c0_23] : memref<8x1xf32, #tpu.memory_space<vmem>>, vector<8x1xf32>
      %cst = arith.constant dense<0xFF800000> : vector<8xf32>
      %40 = vector.multi_reduction <maximumf>, %7, %cst [1] : vector<8x128xf32> to vector<8xf32>
      %41 = vector.shape_cast %40 : vector<8xf32> to vector<8x1xf32>
      %42 = arith.maximumf %39, %41 : vector<8x1xf32>
      %c0_24 = arith.constant 0 : index
      %c0_25 = arith.constant 0 : index
      %43 = vector.load %arg9[%c0_24, %c0_25] : memref<8x1xf32, #tpu.memory_space<vmem>>, vector<8x1xf32>
      %44 = arith.subf %39, %42 : vector<8x1xf32>
      %45 = math.exp %44 : vector<8x1xf32>
      %46 = arith.mulf %43, %45 : vector<8x1xf32>
      %47 = vector.broadcast %42 : vector<8x1xf32> to vector<8x128xf32>
      %48 = arith.subf %7, %47 : vector<8x128xf32>
      %49 = math.exp %48 : vector<8x128xf32>
      %cst_26 = arith.constant dense<0.000000e+00> : vector<8xf32>
      %50 = vector.multi_reduction <add>, %49, %cst_26 [1] : vector<8x128xf32> to vector<8xf32>
      %51 = vector.shape_cast %50 : vector<8xf32> to vector<8x1xf32>
      %52 = arith.addf %46, %51 : vector<8x1xf32>
      %c0_27 = arith.constant 0 : index
      %c0_28 = arith.constant 0 : index
      %53 = vector.load %arg9[%c0_27, %c0_28] : memref<8x1xf32, #tpu.memory_space<vmem>>, vector<8x1xf32>
      tpu.vector_store %arg9[%c0_27, %c0_28], %52 {strides = array<i32>} : memref<8x1xf32, #tpu.memory_space<vmem>>, vector<8x1xf32>,
      %c0_29 = arith.constant 0 : index
      %c0_30 = arith.constant 0 : index
      %54 = vector.load %arg10[%c0_29, %c0_30] : memref<8x1xf32, #tpu.memory_space<vmem>>, vector<8x1xf32>
      %55 = vector.broadcast %34 : vector<8x1xi32> to vector<8x128xi32>
      %56 = arith.cmpi eq, %38, %55 : vector<8x128xi32>
      %cst_31 = arith.constant 0.000000e+00 : f32
      %57 = vector.broadcast %cst_31 : f32 to vector<8x128xf32>
      %58 = arith.select %56, %7, %57 : vector<8x128xi1>, vector<8x128xf32>
      %cst_32 = arith.constant dense<0.000000e+00> : vector<8xf32>
      %59 = vector.multi_reduction <add>, %58, %cst_32 [1] : vector<8x128xf32> to vector<8xf32>
      %60 = vector.shape_cast %59 : vector<8xf32> to vector<8x1xf32>
      %61 = arith.addf %54, %60 : vector<8x1xf32>
      %c0_33 = arith.constant 0 : index
      %c0_34 = arith.constant 0 : index
      %62 = vector.load %arg10[%c0_33, %c0_34] : memref<8x1xf32, #tpu.memory_space<vmem>>, vector<8x1xf32>
      tpu.vector_store %arg10[%c0_33, %c0_34], %61 {strides = array<i32>} : memref<8x1xf32, #tpu.memory_space<vmem>>, vector<8x1xf32>,
      %c0_35 = arith.constant 0 : index
      %c0_36 = arith.constant 0 : index
      %63 = vector.load %arg8[%c0_35, %c0_36] : memref<8x1xf32, #tpu.memory_space<vmem>>, vector<8x1xf32>
      tpu.vector_store %arg8[%c0_35, %c0_36], %42 {strides = array<i32>} : memref<8x1xf32, #tpu.memory_space<vmem>>, vector<8x1xf32>,
    } else {
    }
    %c0_i32_9 = arith.constant 0 : i32
    %16 = arith.cmpi eq, %arg2, %c0_i32_9 : i32
    %c1_i32 = arith.constant 1 : i32
    %17 = arith.cmpi eq, %arg1, %c1_i32 : i32
    %18 = arith.andi %16, %17 : i1
    %19 = arith.extui %18 : i1 to i32
    %c0_i32_10 = arith.constant 0 : i32
    %20 = arith.cmpi ne, %19, %c0_i32_10 : i32
    scf.if %20 {
      %c0_20 = arith.constant 0 : index
      %c0_21 = arith.constant 0 : index
      %34 = vector.load %arg11[%c0_20, %c0_21] : memref<8x1xf32, #tpu.memory_space<vmem>>, vector<8x1xf32>
      %c0_22 = arith.constant 0 : index
      %c0_23 = arith.constant 0 : index
      %35 = vector.load %arg9[%c0_22, %c0_23] : memref<8x1xf32, #tpu.memory_space<vmem>>, vector<8x1xf32>
      %36 = math.log %35 : vector<8x1xf32>
      %c0_24 = arith.constant 0 : index
      %c0_25 = arith.constant 0 : index
      %37 = vector.load %arg8[%c0_24, %c0_25] : memref<8x1xf32, #tpu.memory_space<vmem>>, vector<8x1xf32>
      %38 = arith.addf %36, %37 : vector<8x1xf32>
      %c0_26 = arith.constant 0 : index
      %c0_27 = arith.constant 0 : index
      %39 = vector.load %arg10[%c0_26, %c0_27] : memref<8x1xf32, #tpu.memory_space<vmem>>, vector<8x1xf32>
      %40 = arith.subf %38, %39 : vector<8x1xf32>
      %41 = arith.addf %34, %40 : vector<8x1xf32>
      %c0_28 = arith.constant 0 : index
      %c0_29 = arith.constant 0 : index
      %42 = vector.load %arg11[%c0_28, %c0_29] : memref<8x1xf32, #tpu.memory_space<vmem>>, vector<8x1xf32>
      tpu.vector_store %arg11[%c0_28, %c0_29], %41 {strides = array<i32>} : memref<8x1xf32, #tpu.memory_space<vmem>>, vector<8x1xf32>,
    } else {
    }
    %c0_11 = arith.constant 0 : index
    %c0_12 = arith.constant 0 : index
    %21 = vector.load %arg12[%c0_11, %c0_12] : memref<8x128xf32, #tpu.memory_space<vmem>>, vector<8x128xf32>
    %c0_13 = arith.constant 0 : index
    %c0_14 = arith.constant 0 : index
    %22 = vector.load %arg5[%c0_13, %c0_14] : memref<8x128xf32, #tpu.memory_space<vmem>>, vector<8x128xf32>
    %23 = arith.subf %7, %22 : vector<8x128xf32>
    %24 = math.absf %23 : vector<8x128xf32>
    %25 = arith.addf %21, %24 : vector<8x128xf32>
    %c0_15 = arith.constant 0 : index
    %c0_16 = arith.constant 0 : index
    %26 = vector.load %arg12[%c0_15, %c0_16] : memref<8x128xf32, #tpu.memory_space<vmem>>, vector<8x128xf32>
    tpu.vector_store %arg12[%c0_15, %c0_16], %25 {strides = array<i32>} : memref<8x128xf32, #tpu.memory_space<vmem>>, vector<8x128xf32>,
    %c1_i32_17 = arith.constant 1 : i32
    %27 = arith.cmpi eq, %arg0, %c1_i32_17 : i32
    %c1_i32_18 = arith.constant 1 : i32
    %28 = arith.cmpi eq, %arg1, %c1_i32_18 : i32
    %29 = arith.andi %27, %28 : i1
    %c2_i32 = arith.constant 2 : i32
    %30 = arith.cmpi eq, %arg2, %c2_i32 : i32
    %31 = arith.andi %29, %30 : i1
    %32 = arith.extui %31 : i1 to i32
    %c0_i32_19 = arith.constant 0 : i32
    %33 = arith.cmpi ne, %32, %c0_i32_19 : i32
    scf.if %33 {
      %c0_20 = arith.constant 0 : index
      %c0_21 = arith.constant 0 : index
      %34 = vector.load %arg11[%c0_20, %c0_21] : memref<8x1xf32, #tpu.memory_space<vmem>>, vector<8x1xf32>
      %35 = vector.shape_cast %34 : vector<8x1xf32> to vector<1x8x1xf32>
      %cst = arith.constant dense<0.000000e+00> : vector<1xf32>
      %36 = vector.multi_reduction <add>, %35, %cst [1, 2] : vector<1x8x1xf32> to vector<1xf32>
      %37 = vector.shape_cast %36 : vector<1xf32> to vector<1x1x1xf32>
      %38 = vector.extract %37[0, 0, 0] : f32 from vector<1x1x1xf32>
      %c0_22 = arith.constant 0 : index
      %c0_23 = arith.constant 0 : index
      %39 = memref.load %arg6[%c0_22, %c0_23] : memref<1x1xf32, #tpu.memory_space<smem>>
      memref.store %38, %arg6[%c0_22, %c0_23] : memref<1x1xf32, #tpu.memory_space<smem>>
      %c0_24 = arith.constant 0 : index
      %c0_25 = arith.constant 0 : index
      %40 = vector.load %arg12[%c0_24, %c0_25] : memref<8x128xf32, #tpu.memory_space<vmem>>, vector<8x128xf32>
      %41 = vector.shape_cast %40 : vector<8x128xf32> to vector<1x8x128xf32>
      %cst_26 = arith.constant dense<0.000000e+00> : vector<1xf32>
      %42 = vector.multi_reduction <add>, %41, %cst_26 [1, 2] : vector<1x8x128xf32> to vector<1xf32>
      %43 = vector.shape_cast %42 : vector<1xf32> to vector<1x1x1xf32>
      %44 = vector.extract %43[0, 0, 0] : f32 from vector<1x1x1xf32>
      %c0_27 = arith.constant 0 : index
      %c0_28 = arith.constant 0 : index
      %45 = memref.load %arg7[%c0_27, %c0_28] : memref<1x1xf32, #tpu.memory_space<smem>>
      memref.store %44, %arg7[%c0_27, %c0_28] : memref<1x1xf32, #tpu.memory_space<smem>>
    } else {
    }
    return
  }
  func.func @transform_0(%arg0: i32, %arg1: i32, %arg2: i32) -> (i32, i32) {
    %c0_i32 = arith.constant 0 : i32
    return %arg0, %arg1 : i32, i32
  }
  func.func @transform_1(%arg0: i32, %arg1: i32, %arg2: i32) -> (i32, i32) {
    %c0_i32 = arith.constant 0 : i32
    %c0_i32_0 = arith.constant 0 : i32
    return %arg0, %c0_i32 : i32, i32
  }
  func.func @transform_2(%arg0: i32, %arg1: i32, %arg2: i32) -> (i32, i32) {
    %c2_i32 = arith.constant 2 : i32
    %0 = arith.muli %arg2, %c2_i32 : i32
    %1 = arith.addi %0, %arg0 : i32
    %c0_i32 = arith.constant 0 : i32
    return %1, %arg1 : i32, i32
  }
  func.func @transform_3(%arg0: i32, %arg1: i32, %arg2: i32) -> (i32, i32) {
    %c0_i32 = arith.constant 0 : i32
    %c0_i32_0 = arith.constant 0 : i32
    %c0_i32_1 = arith.constant 0 : i32
    return %c0_i32, %c0_i32_0 : i32, i32
  }
  func.func @transform_4(%arg0: i32, %arg1: i32, %arg2: i32) -> (i32, i32) {
    %c0_i32 = arith.constant 0 : i32
    %c0_i32_0 = arith.constant 0 : i32
    %c0_i32_1 = arith.constant 0 : i32
    return %c0_i32, %c0_i32_0 : i32, i32
  }
}

</mosaic_0001>

<llo_original>
// kernel: _fused_sums.1
$region0: #{_fused_sums.1}
  #allocation0 [shape = 'u32[]', space=smem, size = 0x4, offset = 0x4, fixed_abs, tag = 'smem constant byte address 0x4 - core index']
  #allocation1 [shape = 'u32[144,128]{1,0:T(1,128)}', space=vmem, size = 0x12000, scoped, tag = 'internal scratch']
  #allocation2 [shape = 'f32[8,1]{1,0:T(8,128)}', space=vmem, size = 0x1000, scoped, tag = 'scratch operand']
  #allocation3 [shape = 'f32[8,1]{1,0:T(8,128)}', space=vmem, size = 0x1000, scoped, tag = 'scratch operand']
  #allocation4 [shape = 'f32[8,1]{1,0:T(8,128)}', space=vmem, size = 0x1000, scoped, tag = 'scratch operand']
  #allocation5 [shape = 'f32[8,1]{1,0:T(8,128)}', space=vmem, size = 0x1000, scoped, tag = 'scratch operand']
  #allocation6 [shape = 'f32[8,128]{1,0:T(8,128)}', space=vmem, size = 0x1000, scoped, tag = 'scratch operand']
  %s0 = inlined_call_operand.hbm [shape: f32[16,256], index: 0, kind: input, shape index: {}]
  %s1 = inlined_call_operand.vmem [shape: s32[16,1], index: 1, kind: input, shape index: {}]
  %s2 = inlined_call_operand.hbm [shape: f32[48,256], index: 2, kind: input, shape index: {}]
  %s3 = inlined_call_operand.hbm [shape: f32[1,1], index: 3, kind: output, shape index: {0}]
  %s4 = inlined_call_operand.hbm [shape: f32[1,1], index: 4, kind: output, shape index: {1}]
  %5 = xla_tuple %s3, %s4
  %s6 = sld [smem:[#allocation0]]
  $region81: #{_fused_sums.1} parent=0
    _
  %s8 = ssub.s32 1, %s6
  %s9 = scalar_select 0, %s8, %s6
  $region1: #{_fused_sums.1} parent=0
    #allocation7 [shape = 'u8[8192]{0}', space=vmem, size = 0x2000, scoped, tag = 'input window, operand 0']
    #allocation8 [shape = 's32[2]{0}', space=sflag, size = 0x8, scoped, tag = 'scoped memory for _fused_sums.1']
    #allocation9 [shape = 's32[2]{0}', space=sflag, size = 0x8, scoped, tag = 'scoped memory for _fused_sums.1']
    #allocation10 [shape = 'u8[8192]{0}', space=vmem, size = 0x2000, scoped, tag = 'input window, operand 2']
    #allocation11 [shape = 's32[2]{0}', space=sflag, size = 0x8, scoped, tag = 'scoped memory for _fused_sums.1']
    #allocation12 [shape = 'u8[512]{0}', space=smem, size = 0x200, scoped, tag = 'output window, operand 0, single buffered']
    #allocation13 [shape = 'u8[512]{0}', space=smem, size = 0x200, scoped, tag = 'output window, operand 1, single buffered']
    #allocation14 [shape = 's32[1]{0}', space=sflag, size = 0x4, scoped, tag = 'scoped memory for _fused_sums.1']
    %10 = vsyncpa [#allocation8], 0
    %s11 = scalar_lea.sflag [#allocation8], 1
    %12 = vsyncpa %s11, 0
    %13 = vsyncpa [#allocation11], 0
    %s14 = scalar_lea.sflag [#allocation11], 1
    %15 = vsyncpa %s14, 0
    %16 = vsyncpa [#allocation9], 0
    %17 = vsyncpa [#allocation14], 0
    loop: start=0, step=1, limit=14
    $region2: #{_fused_sums.1} parent=1 // loop_pre_header
      _
    $region3: #{_fused_sums.1} parent=1 // loop_header
      %s19 = sphi 0, %s23
      %p20 = scmp.ge.s32.totalorder %s19, 14
      %s26 = sphi 0, %s45
      %s27 = sphi 0, %s41
      %s28 = sphi 0, %s37
      %s29 = sphi 0, %s26
      %s30 = sphi 0, %s27
      %s31 = sphi 0, %s28
      %s32 = sphi 0, %s29
      %s33 = sphi 0, %s30
      %s34 = sphi 0, %s31
      %s50 = sphi 0, %s52
      %s53 = sphi 0, %s50
      %s54 = sphi 0, %s53
      %s70 = sphi 0, %s54
      %s76 = sphi 0, %s78
      %s79 = sphi 0, %s76
      %s80 = sphi 0, %s79
      %s96 = sphi 0, %s80
      %s108 = sphi 0, %s110
      %s111 = sphi 0, %s108
      %s112 = sphi 0, %s111
      %s128 = sphi 0, %s112
      %s132 = sphi 0, %s132
      %s134 = sphi 0, %s132
      %s135 = sphi 0, %s134
      %s149 = sphi 0, %s135
      %s153 = sphi 0, %s153
      %s155 = sphi 0, %s153
      %s156 = sphi 0, %s155
      %s170 = sphi 0, %s156
    $region4: #{_fused_sums.1} parent=1 // loop_header_branch
      %22 = sbr.rel (%p20) target = $region8
    $region5: #{_fused_sums.1} parent=1 // loop_body
      %s24 = ssub.s32 %s19, 1
      %s25 = ssub.s32 %s19, 2
      %s35 = sadd.s32 1, %s28
      %p36 = scmp.ge.s32.totalorder %s35, 3
      %s37 = scalar_select %p36, 0, %s35
      %s38 = sadd.s32 1, %s27
      %s39 = scalar_select %p36, %s38, %s27
      %p40 = scmp.ge.s32.totalorder %s39, 2
      %s41 = scalar_select %p40, 0, %s39
      %s42 = sadd.s32 1, %s26
      %s43 = scalar_select %p40, %s42, %s26
      %p44 = scmp.ge.s32.totalorder %s43, 2
      %s45 = scalar_select %p44, 0, %s43
      %s46 = ssub.s32 %s26, %s45
      %s47 = ssub.s32 %s27, %s41
      %s48 = sor.u32 %s46, %s47
      %p49 = scmp.eq.s32.totalorder %s48, 0
      %s51 = sadd.s32 %s50, 1
      %s52 = scalar_select %p49, %s50, %s51
      %p55 = pneg %p49
      %p56 = scmp.eq.s32.totalorder %s19, 11
      %p57 = por %p55, %p56
      %p58 = scmp.ne.s32.totalorder %s50, %s53
      %p59 = scmp.eq.s32.totalorder %s19, 0
      %p60 = por %p58, %p59
      %p61 = scmp.ne.s32.totalorder %s50, %s53
      %p62 = scmp.eq.s32.totalorder %s24, 11
      %p63 = por %p61, %p62
      %p64 = scmp.ne.s32.totalorder %s53, %s54
      %p65 = scmp.eq.s32.totalorder %s24, 0
      %p66 = por %p64, %p65
      %p67 = scmp.ne.s32.totalorder %s53, %s54
      %p68 = scmp.eq.s32.totalorder %s25, 11
      %p69 = por %p67, %p68
      %p71 = scmp.ne.s32.totalorder %s54, %s70
      %p72 = scmp.eq.s32.totalorder %s25, 0
      %p73 = por %p71, %p72
      %s74 = ssub.s32 %s26, %s45
      %p75 = scmp.eq.s32.totalorder %s74, 0
      %s77 = sadd.s32 %s76, 1
      %s78 = scalar_select %p75, %s76, %s77
      %p81 = pneg %p75
      %p82 = scmp.eq.s32.totalorder %s19, 11
      %p83 = por %p81, %p82
      %p84 = scmp.ne.s32.totalorder %s76, %s79
      %p85 = scmp.eq.s32.totalorder %s19, 0
      %p86 = por %p84, %p85
      %p87 = scmp.ne.s32.totalorder %s76, %s79
      %p88 = scmp.eq.s32.totalorder %s24, 11
      %p89 = por %p87, %p88
      %p90 = scmp.ne.s32.totalorder %s79, %s80
      %p91 = scmp.eq.s32.totalorder %s24, 0
      %p92 = por %p90, %p91
      %p93 = scmp.ne.s32.totalorder %s79, %s80
      %p94 = scmp.eq.s32.totalorder %s25, 11
      %p95 = por %p93, %p94
      %p97 = scmp.ne.s32.totalorder %s80, %s96
      %p98 = scmp.eq.s32.totalorder %s25, 0
      %p99 = por %p97, %p98
      %s100 = smul.u32 %s28, 2
      %s101 = sadd.s32 %s100, %s26
      %s102 = smul.u32 %s37, 2
      %s103 = sadd.s32 %s102, %s45
      %s104 = ssub.s32 %s101, %s103
      %s105 = ssub.s32 %s27, %s41
      %s106 = sor.u32 %s104, %s105
      %p107 = scmp.eq.s32.totalorder %s106, 0
      %s109 = sadd.s32 %s108, 1
      %s110 = scalar_select %p107, %s108, %s109
      %p113 = pneg %p107
      %p114 = scmp.eq.s32.totalorder %s19, 11
      %p115 = por %p113, %p114
      %p116 = scmp.ne.s32.totalorder %s108, %s111
      %p117 = scmp.eq.s32.totalorder %s19, 0
      %p118 = por %p116, %p117
      %p119 = scmp.ne.s32.totalorder %s108, %s111
      %p120 = scmp.eq.s32.totalorder %s24, 11
      %p121 = por %p119, %p120
      %p122 = scmp.ne.s32.totalorder %s111, %s112
      %p123 = scmp.eq.s32.totalorder %s24, 0
      %p124 = por %p122, %p123
      %p125 = scmp.ne.s32.totalorder %s111, %s112
      %p126 = scmp.eq.s32.totalorder %s25, 11
      %p127 = por %p125, %p126
      %p129 = scmp.ne.s32.totalorder %s112, %s128
      %p130 = scmp.eq.s32.totalorder %s25, 0
      %p131 = por %p129, %p130
      %s133 = sadd.s32 %s132, 1
      %p136 = scmp.eq.s32.totalorder %s19, 11
      %p137 = scmp.ne.s32.totalorder %s132, %s134
      %p138 = scmp.eq.s32.totalorder %s19, 0
      %p139 = por %p137, %p138
      %p140 = scmp.ne.s32.totalorder %s132, %s134
      %p141 = scmp.eq.s32.totalorder %s24, 11
      %p142 = por %p140, %p141
      %p143 = scmp.ne.s32.totalorder %s134, %s135
      %p144 = scmp.eq.s32.totalorder %s24, 0
      %p145 = por %p143, %p144
      %p146 = scmp.ne.s32.totalorder %s134, %s135
      %p147 = scmp.eq.s32.totalorder %s25, 11
      %p148 = por %p146, %p147
      %p150 = scmp.ne.s32.totalorder %s135, %s149
      %p151 = scmp.eq.s32.totalorder %s25, 0
      %p152 = por %p150, %p151
      %s154 = sadd.s32 %s153, 1
      %p157 = scmp.eq.s32.totalorder %s19, 11
      %p158 = scmp.ne.s32.totalorder %s153, %s155
      %p159 = scmp.eq.s32.totalorder %s19, 0
      %p160 = por %p158, %p159
      %p161 = scmp.ne.s32.totalorder %s153, %s155
      %p162 = scmp.eq.s32.totalorder %s24, 11
      %p163 = por %p161, %p162
      %p164 = scmp.ne.s32.totalorder %s155, %s156
      %p165 = scmp.eq.s32.totalorder %s24, 0
      %p166 = por %p164, %p165
      %p167 = scmp.ne.s32.totalorder %s155, %s156
      %p168 = scmp.eq.s32.totalorder %s25, 11
      %p169 = por %p167, %p168
      %p171 = scmp.ne.s32.totalorder %s156, %s170
      %p172 = scmp.eq.s32.totalorder %s25, 0
      %p173 = por %p171, %p172
      %p174 = scmp.le.s32.totalorder 1, %s19
      %p175 = scmp.lt.s32.totalorder %s19, 13
      %p176 = pnand %p174, %p175
      %p177 = pneg %p176
      // Predicated region
      $region9: #{_fused_sums.1} parent=5 // pred_check
        _
      $region10: #{_fused_sums.1} parent=5 // pred_check_branch
        %179 = sbr.rel (%p176) target = $region12
      $region11: #{_fused_sums.1} parent=5 // pred_region
        %s180 = ssub.s32 %s19, 1
      $region12: #{_fused_sums.1} parent=5 // pred_fallthru
        _
      %p181 = scmp.lt.s32.totalorder %s19, 12
      // Predicated region
      $region13: #{_fused_sums.1} parent=5 // pred_check
        %p182 = pneg %p181
      $region14: #{_fused_sums.1} parent=5 // pred_check_branch
        %184 = sbr.rel (%p182) target = $region16
      $region15: #{_fused_sums.1} parent=5 // pred_region
        // Predicated region
        $region17: #{_fused_sums.1} parent=15 // pred_check
          %p185 = pneg %p60
        $region18: #{_fused_sums.1} parent=15 // pred_check_branch
          %187 = sbr.rel (%p185) target = $region20
        $region19: #{_fused_sums.1} parent=15 // pred_region
          %s188 = sand.u32 %s50, 1
          %s189 = scalar_lea.sflag [#allocation8], %s188
          %s190 = sand.u32 %s50, 1
          %s191 = smul.addr %s190, 8
          %s192 = scalar_lea.vmem [#allocation7], %s191
          %s194 = ssub.s32 128, 128
          %195 = vsyncadd %s189, %s194
          %s196 = smul.addr %s26, 2
          %s197 = sadd.s32 %s27, %s196
          %s198 = smul.addr %s197, 128
          %s199 = scalar_lea.hbm %s0, %s198
          %s201 = sshll.u32 %s192, 4
          %s202 = int_to_ptr.vmem [resolvable:$true] %s201
          %204 = dma.hbm_to_vmem [thread:$0]  %s199, 128, %s202, %s189
        $region20: #{_fused_sums.1} parent=15 // pred_fallthru
          _
        // Predicated region
        $region21: #{_fused_sums.1} parent=15 // pred_check
          %p205 = pneg %p86
        $region22: #{_fused_sums.1} parent=15 // pred_check_branch
          %207 = sbr.rel (%p205) target = $region24
        $region23: #{_fused_sums.1} parent=15 // pred_region
          %p208 = scmp.lt.s32.totalorder %s26, 1
          %s209 = scalar_select %p208, %s26, 1
          %s210 = smul.addr %s209, 8
          %s211 = scalar_lea.vmem %s1, %s210
        $region24: #{_fused_sums.1} parent=15 // pred_fallthru
          _
        // Predicated region
        $region25: #{_fused_sums.1} parent=15 // pred_check
          %p212 = pneg %p118
        $region26: #{_fused_sums.1} parent=15 // pred_check_branch
          %214 = sbr.rel (%p212) target = $region28
        $region27: #{_fused_sums.1} parent=15 // pred_region
          %s215 = sand.u32 %s108, 1
          %s216 = scalar_lea.sflag [#allocation11], %s215
          %s217 = sand.u32 %s108, 1
          %s218 = smul.addr %s217, 8
          %s219 = scalar_lea.vmem [#allocation10], %s218
          %s220 = smul.u32 %s28, 2
          %s221 = sadd.s32 %s220, %s26
          %s223 = ssub.s32 128, 128
          %224 = vsyncadd %s216, %s223
          %s225 = smul.addr %s221, 2
          %s226 = sadd.s32 %s27, %s225
          %s227 = smul.addr %s226, 128
          %s228 = scalar_lea.hbm %s2, %s227
          %s230 = sshll.u32 %s219, 4
          %s231 = int_to_ptr.vmem [resolvable:$true] %s230
          %233 = dma.hbm_to_vmem [thread:$0]  %s228, 128, %s231, %s216
        $region28: #{_fused_sums.1} parent=15 // pred_fallthru
          _
      $region16: #{_fused_sums.1} parent=5 // pred_fallthru
        _
      %p234 = scmp.le.s32.totalorder 1, %s19
      %p235 = scmp.lt.s32.totalorder %s19, 13
      %p236 = pnand %p234, %p235
      %p237 = pneg %p236
      // Predicated region
      $region29: #{_fused_sums.1} parent=5 // pred_check
        _
      $region30: #{_fused_sums.1} parent=5 // pred_check_branch
        %239 = sbr.rel (%p236) target = $region32
      $region31: #{_fused_sums.1} parent=5 // pred_region
        %s240 = ssub.s32 %s19, 1
        %s241 = sand.u32 %s53, 1
        %s242 = scalar_lea.sflag [#allocation8], %s241
        %s243 = sand.u32 %s53, 1
        %s244 = smul.addr %s243, 8
        %s245 = scalar_lea.vmem [#allocation7], %s244
        // Predicated region
        $region33: #{_fused_sums.1} parent=31 // pred_check
          %p246 = pneg %p66
        $region34: #{_fused_sums.1} parent=31 // pred_check_branch
          %248 = sbr.rel (%p246) target = $region36
        $region35: #{_fused_sums.1} parent=31 // pred_region
          %249 = dma.done %s242, 128
        $region36: #{_fused_sums.1} parent=31 // pred_fallthru
          _
        %s250 = sand.u32 %s111, 1
        %s251 = scalar_lea.sflag [#allocation11], %s250
        %s252 = sand.u32 %s111, 1
        %s253 = smul.addr %s252, 8
        %s254 = scalar_lea.vmem [#allocation10], %s253
        // Predicated region
        $region37: #{_fused_sums.1} parent=31 // pred_check
          %p255 = pneg %p124
        $region38: #{_fused_sums.1} parent=31 // pred_check_branch
          %257 = sbr.rel (%p255) target = $region40
        $region39: #{_fused_sums.1} parent=31 // pred_region
          %258 = dma.done %s251, 128
        $region40: #{_fused_sums.1} parent=31 // pred_fallthru
          _
        %s259 = sand.u32 %s53, 1
        %s260 = scalar_lea.sflag [#allocation8], %s259
        %s261 = sand.u32 %s53, 1
        %s262 = smul.addr %s261, 8
        %s263 = scalar_lea.vmem [#allocation7], %s262
        %p264 = pneg %p66
        %p265 = pneg %p63
        %p266 = scmp.lt.s32.totalorder %s29, 1
        %s267 = scalar_select %p266, %s29, 1
        %s268 = smul.addr %s267, 8
        %s269 = scalar_lea.vmem %s1, %s268
        %p270 = pneg %p92
        %p271 = pneg %p89
        %s272 = sand.u32 %s111, 1
        %s273 = scalar_lea.sflag [#allocation11], %s272
        %s274 = sand.u32 %s111, 1
        %s275 = smul.addr %s274, 8
        %s276 = scalar_lea.vmem [#allocation10], %s275
        %p277 = pneg %p124
        %p278 = pneg %p121
        %p279 = pneg %p145
        %p280 = pneg %p142
        %p281 = pneg %p166
        %p282 = pneg %p163
        %p283 = scmp.lt.s32.totalorder %s29, 1
        %s284 = scalar_select %p283, %s29, 1
        %s285 = smul.addr %s284, 8
        %s286 = scalar_lea.vmem %s1, %s285
        %s287 = smul.u32 %s31, 2
        %s288 = sadd.s32 %s287, %s29
        %p289 = scmp.eq.s32.totalorder %s29, 0
        %p290 = scmp.eq.s32.totalorder %s30, 0
        %p291 = pnand %p289, %p290
        %p292 = pneg %p291
        %p293 = scmp.eq.s32.totalorder %s31, 0
        %p294 = pnand %p292, %p293
        %p295 = pneg %p294
        // Predicated region
        $region41: #{_fused_sums.1} parent=31 // pred_check
          _
        $region42: #{_fused_sums.1} parent=31 // pred_check_branch
          %297 = sbr.rel (%p294) target = $region44
        $region43: #{_fused_sums.1} parent=31 // pred_region
          %vm298 = vcmask 7168
          %299 = vst.msk [vmem:[#allocation5] sm:$0xff] %vm298, 0.0
          %300 = vst [vmem:[#allocation6] sm:$0xff] 0.0
        $region44: #{_fused_sums.1} parent=31 // pred_fallthru
          _
        %v301 = vld [vmem:[%s245] sm:$0xff]
        %p302 = pnand %p293, %p290
        %p303 = pneg %p302
        // Predicated region
        $region45: #{_fused_sums.1} parent=31 // pred_check
          _
        $region46: #{_fused_sums.1} parent=31 // pred_check_branch
          %305 = sbr.rel (%p302) target = $region48
        $region47: #{_fused_sums.1} parent=31 // pred_region
          %vm306 = vcmask 7168
          %307 = vst.msk [vmem:[#allocation2] sm:$0xff] %vm306, -inf
          %308 = vst.msk [vmem:[#allocation3] sm:$0xff] %vm306, 0.0
          %309 = vst.msk [vmem:[#allocation4] sm:$0xff] %vm306, 0.0
        $region48: #{_fused_sums.1} parent=31 // pred_fallthru
          _
        // Predicated region
        $region49: #{_fused_sums.1} parent=31 // pred_check
          %p310 = pneg %p293
        $region50: #{_fused_sums.1} parent=31 // pred_check_branch
          %312 = sbr.rel (%p310) target = $region52
        $region51: #{_fused_sums.1} parent=31 // pred_region
          %v313 = vld [vmem:[%s286] sm:$0xff]
          %s314 = smul.u32 %s30, 128
          %v315 = vlaneseq
          %v316 = vand.u32 %v315, 127
          %v317 = vstv %s314
          %v318 = vadd.s32 %v317, %v316
          %v319 = vld [vmem:[#allocation2] sm:$0xff]
          %320 = vmax.xlane.f32.xlu0 %v301
          %v321 = vpop.xlane.xlu0 %320
          %v322 = vmax.f32 %v319, %v321
          %v323 = vld [vmem:[#allocation3] sm:$0xff]
          %v324 = vsub.f32 %v319, %v322
          %v325 = vmul.f32 %v324, 1.442695
          %v326 = vpow.pop %v325
          %v327 = vmul.f32 %v323, %v326
          %329 = vset.pattern.permute.xlu0 0
          %330 = vperm.xlu0 %329, %v322
          %v331 = vpop.permute.xlu0 %330
          %v333 = vsub.f32 %v301, %v331
          %v334 = vmul.f32 %v333, 1.442695
          %v335 = vpow.pop %v334
          %336 = vadd.xlane.f32.xlu0 %v335
          %v337 = vpop.xlane.xlu0 %336
          %v338 = vadd.f32 %v327, %v337
          %vm339 = vcmask 7168
          %340 = vst.msk [vmem:[#allocation3] sm:$0xff] %vm339, %v338
          %v341 = vld [vmem:[#allocation4] sm:$0xff]
          %342 = vset.pattern.permute.xlu0 0
          %343 = vperm.xlu0 %342, %v313
          %v344 = vpop.permute.xlu0 %343
          %vm345 = vcmp.eq.s32.totalorder %v318, %v344
          %v346 = vsel %vm345, %v301, 0.0
          %347 = vadd.xlane.f32.xlu0 %v346
          %v348 = vpop.xlane.xlu0 %347
          %v349 = vadd.f32 %v341, %v348
          %350 = vst.msk [vmem:[#allocation4] sm:$0xff] %vm339, %v349
          %351 = vst.msk [vmem:[#allocation2] sm:$0xff] %vm339, %v322
        $region52: #{_fused_sums.1} parent=31 // pred_fallthru
          _
        %p352 = scmp.eq.s32.totalorder %s30, 1
        %p353 = pnand %p293, %p352
        %p354 = pneg %p353
        // Predicated region
        $region53: #{_fused_sums.1} parent=31 // pred_check
          _
        $region54: #{_fused_sums.1} parent=31 // pred_check_branch
          %356 = sbr.rel (%p353) target = $region56
        $region55: #{_fused_sums.1} parent=31 // pred_region
          %v357 = vld [vmem:[#allocation5] sm:$0xff]
          %v358 = vld [vmem:[#allocation3] sm:$0xff]
          %v359 = vlog2.pop %v358
          %v360 = vmul.f32 %v359, 0.6931472
          %v361 = vld [vmem:[#allocation2] sm:$0xff]
          %v362 = vadd.f32 %v360, %v361
          %v363 = vld [vmem:[#allocation4] sm:$0xff]
          %v364 = vsub.f32 %v362, %v363
          %v365 = vadd.f32 %v357, %v364
          %vm366 = vcmask 7168
          %367 = vst.msk [vmem:[#allocation5] sm:$0xff] %vm366, %v365
        $region56: #{_fused_sums.1} parent=31 // pred_fallthru
          _
        %v368 = vld [vmem:[#allocation6] sm:$0xff]
        %v369 = vld [vmem:[%s254] sm:$0xff]
        %v370 = vsub.f32 %v301, %v369
        %v371 = vand.u32 2147483647, %v370
        %v372 = vadd.f32 %v368, %v371
        %373 = vst [vmem:[#allocation6] sm:$0xff] %v372
        %p374 = scmp.eq.s32.totalorder %s29, 1
        %p375 = pnand %p374, %p352
        %p376 = pneg %p375
        %p377 = scmp.eq.s32.totalorder %s31, 2
        %p378 = pnand %p376, %p377
        %p379 = pneg %p378
        // Predicated region
        $region57: #{_fused_sums.1} parent=31 // pred_check
          _
        $region58: #{_fused_sums.1} parent=31 // pred_check_branch
          %381 = sbr.rel (%p378) target = $region60
        $region59: #{_fused_sums.1} parent=31 // pred_region
          %v382 = vld [vmem:[#allocation5] sm:$0xff]
          %vm383 = vcmask 7168
          %v384 = vsel %vm383, %v382, 0.0
          %385 = vadd.xlane.f32.xlu0 %v384
          %v386 = vpop.xlane.xlu0 %385
          %v387 = vrot.slane %v386, 4
          %v388 = vadd.f32 %v386, %v387
          %v389 = vrot.slane %v388, 2
          %v390 = vadd.f32 %v388, %v389
          %v391 = vrot.slane %v390, 1
          %v392 = vadd.f32 %v390, %v391
          %s393 = vtos %v392
          %s394 = scalar_lea.smem [#allocation12], 0
          %395 = sst [smem:[%s394]] %s393
          %v396 = vld [vmem:[#allocation6] sm:$0xff]
          %397 = vadd.xlane.f32.xlu0 %v396
          %v398 = vpop.xlane.xlu0 %397
          %v399 = vrot.slane %v398, 4
          %v400 = vadd.f32 %v398, %v399
          %v401 = vrot.slane %v400, 2
          %v402 = vadd.f32 %v400, %v401
          %v403 = vrot.slane %v402, 1
          %v404 = vadd.f32 %v402, %v403
          %s405 = vtos %v404
          %s406 = scalar_lea.smem [#allocation13], 0
          %407 = sst [smem:[%s406]] %s405
        $region60: #{_fused_sums.1} parent=31 // pred_fallthru
          _
        // Predicated region
        $region61: #{_fused_sums.1} parent=31 // pred_check
          %p408 = pneg %p142
        $region62: #{_fused_sums.1} parent=31 // pred_check_branch
          %410 = sbr.rel (%p408) target = $region64
        $region63: #{_fused_sums.1} parent=31 // pred_region
          %s412 = ssub.s32 16, 16
          %413 = vsyncadd [#allocation9], %s412
          %416 = dma.smem_to_hbm [#allocation12], 16, %s3, [#allocation9]
        $region64: #{_fused_sums.1} parent=31 // pred_fallthru
          _
        // Predicated region
        $region65: #{_fused_sums.1} parent=31 // pred_check
          %p417 = pneg %p163
        $region66: #{_fused_sums.1} parent=31 // pred_check_branch
          %419 = sbr.rel (%p417) target = $region68
        $region67: #{_fused_sums.1} parent=31 // pred_region
          %s421 = ssub.s32 16, 16
          %422 = vsyncadd [#allocation14], %s421
          %425 = dma.smem_to_hbm [#allocation13], 16, %s4, [#allocation14]
        $region68: #{_fused_sums.1} parent=31 // pred_fallthru
          _
        // Predicated region
        $region69: #{_fused_sums.1} parent=31 // pred_check
          %p426 = pneg %p142
        $region70: #{_fused_sums.1} parent=31 // pred_check_branch
          %428 = sbr.rel (%p426) target = $region72
        $region71: #{_fused_sums.1} parent=31 // pred_region
          %429 = dma.done [#allocation9], 16
        $region72: #{_fused_sums.1} parent=31 // pred_fallthru
          _
        // Predicated region
        $region73: #{_fused_sums.1} parent=31 // pred_check
          %p430 = pneg %p163
        $region74: #{_fused_sums.1} parent=31 // pred_check_branch
          %432 = sbr.rel (%p430) target = $region76
        $region75: #{_fused_sums.1} parent=31 // pred_region
          %433 = dma.done [#allocation14], 16
        $region76: #{_fused_sums.1} parent=31 // pred_fallthru
          _
        %434 = sfence
      $region32: #{_fused_sums.1} parent=5 // pred_fallthru
        _
      %p435 = scmp.le.s32.totalorder 2, %s19
      // Predicated region
      $region77: #{_fused_sums.1} parent=5 // pred_check
        %p436 = pneg %p435
      $region78: #{_fused_sums.1} parent=5 // pred_check_branch
        %438 = sbr.rel (%p436) target = $region80
      $region79: #{_fused_sums.1} parent=5 // pred_region
        %s439 = ssub.s32 %s19, 2
      $region80: #{_fused_sums.1} parent=5 // pred_fallthru
        _
    $region6: #{_fused_sums.1} parent=1 // loop_footer
      %s23 = sadd.s32 1, %s19
    $region7: #{_fused_sums.1} parent=1 // loop_footer_branch
      %18 = sbr.rel target = $region3
    $region8: #{_fused_sums.1} parent=1 // loop_exit
      _
    %440 = vsyncpa [#allocation8], 1
    %s441 = scalar_lea.sflag [#allocation8], 1
    %442 = vsyncpa %s441, 1
    %443 = vsyncpa [#allocation11], 1
    %s444 = scalar_lea.sflag [#allocation11], 1
    %445 = vsyncpa %s444, 1
    %446 = vsyncpa [#allocation9], 1
    %s447 = scalar_lea.sflag [#allocation9], 1
    %448 = vsyncpa %s447, 1
    %449 = vsyncpa [#allocation14], 1

</llo_original>
